<compile_context>
chip_gen: v5e
topology: v5e:2x2
jax: 0.10.0
libtpu: 0.0.40
codegen_flags: <defaults>
</compile_context>

<pallas_src>
import jax
import jax.numpy as jnp
from jax.experimental import pallas as pl
from jax.experimental.pallas import tpu as pltpu

_LANES = 128
_SUBLANES = 8
_PAD_GRANULE = _SUBLANES * _LANES          # pad flat size to a (8,128) tile
# Row-block rounded to a multiple of 32 sublanes: legal second-minor tiling
# for f32 (8), bf16 (16) and int8/fp8 (32) alike.
_SUBLANE_MULTIPLE = 32
# Below this size the fixed pallas_call launch/pipeline setup dominates; use a
# plain XLA copy instead.
_MIN_PALLAS_BYTES_DEFAULT = 1 << 20        # 1 MiB


def _copy_kernel(x_ref, o_ref):
    # Pure pass-through: VMEM tile in -> VMEM tile out.
    o_ref[...] = x_ref[...]


def base_model_forward(x):
    """BaseModel.forward() is `pass`: the stored input flows through unchanged.

    Pure identity => no kernel, no HBM traffic (the optimal implementation).
    """
    return x


def _device_kind():
    try:
        return jax.devices()[0].device_kind.lower()
    except Exception:
        return ""


def _tile_bytes_for_chip(kind):
    # 2-in + 2-out double buffers => footprint ~= 4x tile.  All choices stay
    # under the scoped-VMEM default (v5e 16 MiB, v6e/v7x 32 MiB).
    if "v7" in kind:
        return 6 * 1024 * 1024   # ~24 MiB footprint; cuts per-step overhead <7%
    if "v6" in kind:
        return 4 * 1024 * 1024   # ~16 MiB footprint
    return 2 * 1024 * 1024       # v5e / unknown: stay well clear of 16 MiB cap


def _dimension_semantics_candidates(kind, grid_n):
    # On v7x, core-parallel semantics are what actually shard grid steps
    # across the 2 TensorCores (pure DMA-bound copy -> up to ~2x HBM BW).
    # Keep a plain "parallel" fallback so the kernel always runs cleanly.
    if "v7" in kind and grid_n >= 2 and grid_n % 2 == 0:
        return [(pltpu.CORE_PARALLEL,), ("parallel",)]
    return [("parallel",)]


def _as_lane_dense_2d(x):
    """Flatten + zero-pad to a lane-dense (rows, 128) slab.

    Padding to a multiple of 8*128 keeps every store a full unmasked `vst`
    (masked partial stores measured up to ~4.5x worse for narrow lanes) at the
    cost of copying at most 1023 extra elements.  Returns (slab, valid_count).
    """
    flat = x.reshape(-1)
    total = flat.size
    pad = (-total) % _PAD_GRANULE
    if pad:
        flat = jnp.pad(flat, (0, pad))
    return flat.reshape(-1, _LANES), total


def _pallas_copy_2d(x2, block_rows, semantics):
    rows, cols = x2.shape
    nbytes = rows * cols * x2.dtype.itemsize
    return pl.pallas_call(
        _copy_kernel,
        out_shape=jax.ShapeDtypeStruct((rows, cols), x2.dtype),
        grid=(pl.cdiv(rows, block_rows),),
        in_specs=[pl.BlockSpec((block_rows, cols), lambda i: (i, 0))],
        out_specs=pl.BlockSpec((block_rows, cols), lambda i: (i, 0)),
        # Bandwidth-only op: help XLA overlap it with surrounding compute.
        cost_estimate=pl.CostEstimate(
            flops=0, transcendentals=0, bytes_accessed=2 * nbytes),
        compiler_params=pltpu.CompilerParams(dimension_semantics=semantics),
    )(x2)


def base_model_identity_copy(x, *, min_pallas_bytes=_MIN_PALLAS_BYTES_DEFAULT):
    """Explicit on-device identity copy returning a fresh buffer.

    Only use when a distinct output buffer is genuinely required; otherwise
    call base_model_forward (zero device work).
    """
    nbytes = x.size * x.dtype.itemsize
    if nbytes < min_pallas_bytes:
        # Tiny tensors: the pallas_call launch + pipeline setup dominates;
        # a plain fused XLA copy already hits the roofline.
        return jnp.copy(x)

    orig_shape = x.shape
    x2, valid = _as_lane_dense_2d(x)
    rows, cols = x2.shape

    kind = _device_kind()
    tile_bytes = _tile_bytes_for_chip(kind)
    bytes_per_row = cols * x2.dtype.itemsize
    block_rows = max(1, tile_bytes // max(bytes_per_row, 1))
    block_rows = max(_SUBLANE_MULTIPLE,
                     (block_rows // _SUBLANE_MULTIPLE) * _SUBLANE_MULTIPLE)
    if block_rows >= rows:
        block_rows = rows  # full-extent block: always a legal tiling
    grid_n = pl.cdiv(rows, block_rows)

    out2 = None
    last_err = None
    for semantics in _dimension_semantics_candidates(kind, grid_n):
        try:
            out2 = jax.block_until_ready(_pallas_copy_2d(x2, block_rows, semantics))
            break
        except Exception as e:  # pragma: no cover - CORE_PARALLEL fallback
            last_err = e
            out2 = None
    if out2 is None:
        raise last_err

    out_flat = out2.reshape(-1)
    if out_flat.size != valid:
        out_flat = out_flat[:valid]   # drop the zero padding
    return out_flat.reshape(orig_shape)


class BaseModelJAX:
    """Minimal JAX mirror of the PyTorch BaseModel skeleton."""

    def name(self):
        return "BaseModel"

    def set_input(self, inp):
        self.input = inp

    def forward(self):
        # PyTorch forward() is `pass`; identity requires no device work, so the
        # kernel is elided entirely.
        self.input = base_model_forward(self.input)

    def get_current_visuals(self):
        return self.input

    def get_current_errors(self):
        return {}

    # TODO(synk): initialize/opt bookkeeping, save/load_network, optimizers and
    # LR schedulers are host-side checkpoint / training-loop plumbing with no
    # Pallas equivalent; intentionally omitted.


if __name__ == "__main__":
    key = jax.random.PRNGKey(0)
    x = jax.random.normal(key, (2, 4, 16, 16), dtype=jnp.float32)  # NCHW

    # Module-level semantics: forward() is a no-op identity (zero device work).
    model = BaseModelJAX()
    model.set_input(x)
    model.forward()
    vis = model.get_current_visuals()
    assert vis is x
    assert model.get_current_errors() == {}

    # Small-input fast path: plain XLA copy, no Pallas launch.
    out_fast = jax.block_until_ready(base_model_identity_copy(x))
    assert out_fast.shape == x.shape and out_fast.dtype == x.dtype
    assert bool(jnp.all(out_fast == x))

    # Force the Pallas path once so the kernel is actually exercised on device.
    out = jax.block_until_ready(base_model_identity_copy(x, min_pallas_bytes=0))
    assert out.shape == x.shape and out.dtype == x.dtype
    assert bool(jnp.all(out == x))

    # Also exercise the padded (size not divisible by 128) Pallas path.
    y = jax.random.normal(jax.random.PRNGKey(1), (2, 3, 7, 5), dtype=jnp.float32)
    out_y = jax.block_until_ready(base_model_identity_copy(y, min_pallas_bytes=0))
    assert out_y.shape == y.shape and bool(jnp.all(out_y == y))

    print("KERNEL_OK")
</pallas_src>

<mosaic_0001>
module attributes {stable_mosaic.version = 11 : i64} {
  func.func @_copy_kernel(%arg0: i32, %arg1: memref<16x128xf32, #tpu.memory_space<vmem>>, %arg2: memref<16x128xf32, #tpu.memory_space<vmem>>) attributes {dimension_semantics = [#tpu.dimension_semantics<parallel>], iteration_bounds = array<i64: 1>, scalar_prefetch = 0 : i64, scratch_operands = 0 : i64, tpu.core_type = #tpu.core_type<tc>, window_params = [{transform_indices = @transform_0, window_bounds = array<i64: 16, 128>}, {transform_indices = @transform_1, window_bounds = array<i64: 16, 128>}]} {
    %c0 = arith.constant 0 : index
    %c0_0 = arith.constant 0 : index
    %0 = vector.load %arg1[%c0, %c0_0] : memref<16x128xf32, #tpu.memory_space<vmem>>, vector<16x128xf32>
    %c0_1 = arith.constant 0 : index
    %c0_2 = arith.constant 0 : index
    %1 = vector.load %arg2[%c0_1, %c0_2] : memref<16x128xf32, #tpu.memory_space<vmem>>, vector<16x128xf32>
    tpu.vector_store %arg2[%c0_1, %c0_2], %0 {strides = array<i32>} : memref<16x128xf32, #tpu.memory_space<vmem>>, vector<16x128xf32>,
    return
  }
  func.func @transform_0(%arg0: i32) -> (i32, i32) {
    %c0_i32 = arith.constant 0 : i32
    %c0_i32_0 = arith.constant 0 : i32
    return %arg0, %c0_i32 : i32, i32
  }
  func.func @transform_1(%arg0: i32) -> (i32, i32) {
    %c0_i32 = arith.constant 0 : i32
    %c0_i32_0 = arith.constant 0 : i32
    return %arg0, %c0_i32 : i32, i32
  }
}

</mosaic_0001>

<llo_original>
// kernel: tpu_custom_call.1
$region0: #{tpu_custom_call.1}
  #allocation0 [shape = 'u32[]', space=smem, size = 0x4, offset = 0x4, fixed_abs, tag = 'smem constant byte address 0x4 - core index']
  #allocation1 [shape = 'u32[72,128]{1,0:T(1,128)}', space=vmem, size = 0x9000, scoped, tag = 'internal scratch']
  %s0 = inlined_call_operand.hbm [shape: f32[16,128], index: 0, kind: input, shape index: {}]
  %s1 = inlined_call_operand.hbm [shape: f32[16,128], index: 1, kind: output, shape index: {}]
  %s2 = sld [smem:[#allocation0]]
  $region18: #{tpu_custom_call.1} parent=0
    _
  %s4 = ssub.s32 1, %s2
  %s5 = scalar_select 0, %s4, %s2
  $region1: #{tpu_custom_call.1} parent=0
    #allocation2 [shape = 'u8[8192]{0}', space=vmem, size = 0x2000, scoped, tag = 'input window, operand 0, single buffered']
    #allocation3 [shape = 's32[1]{0}', space=sflag, size = 0x4, scoped, tag = 'scoped memory for tpu_custom_call.1']
    #allocation4 [shape = 's32[1]{0}', space=sflag, size = 0x4, scoped, tag = 'scoped memory for tpu_custom_call.1']
    #allocation5 [shape = 'u8[8192]{0}', space=vmem, size = 0x2000, scoped, tag = 'output window, operand 0, single buffered']
    %6 = vsyncpa [#allocation3], 0
    %7 = vsyncpa [#allocation4], 0
    // Predicated region
    $region2: #{tpu_custom_call.1} parent=1 // pred_check
      _
    $region3: #{tpu_custom_call.1} parent=1 // pred_check_branch
      %9 = sbr.rel (0) target = $region5
    $region4: #{tpu_custom_call.1} parent=1 // pred_region
      %11 = vsyncadd [#allocation3], 0
      %s12 = sshll.u32 %s0, 4
      %s13 = int_to_ptr.hbm [resolvable:$true] %s12
      %s14 = sshll.u32 [#allocation2], 4
      %s15 = int_to_ptr.vmem [resolvable:$true] %s14
      %20 = dma.hbm_to_vmem [thread:$0]  %s13, 256, %s15, [#allocation3], 128, 128, 8
    $region5: #{tpu_custom_call.1} parent=1 // pred_fallthru
      _
    // Predicated region
    $region6: #{tpu_custom_call.1} parent=1 // pred_check
      _
    $region7: #{tpu_custom_call.1} parent=1 // pred_check_branch
      %22 = sbr.rel (0) target = $region9
    $region8: #{tpu_custom_call.1} parent=1 // pred_region
      %24 = dma.done [#allocation3], 256
    $region9: #{tpu_custom_call.1} parent=1 // pred_fallthru
      _
    %v25 = vld [vmem:[#allocation2] sm:$0xff]
    %v26 = vld [vmem:[#allocation2 + $0x8] sm:$0xff]
    %27 = vst [vmem:[#allocation5] sm:$0xff] %v25
    %28 = vst [vmem:[#allocation5 + $0x8] sm:$0xff] %v26
    // Predicated region
    $region10: #{tpu_custom_call.1} parent=1 // pred_check
      _
    $region11: #{tpu_custom_call.1} parent=1 // pred_check_branch
      %30 = sbr.rel (0) target = $region13
    $region12: #{tpu_custom_call.1} parent=1 // pred_region
      %32 = vsyncadd [#allocation4], 0
      %s33 = sshll.u32 [#allocation5], 4
      %s34 = int_to_ptr.vmem [resolvable:$true] %s33
      %s35 = sshll.u32 %s1, 4
      %s36 = int_to_ptr.hbm [resolvable:$true] %s35
      %41 = dma.vmem_to_hbm [thread:$0]  %s34, 256, %s36, [#allocation4], 128, 128, 8
    $region13: #{tpu_custom_call.1} parent=1 // pred_fallthru
      _
    // Predicated region
    $region14: #{tpu_custom_call.1} parent=1 // pred_check
      _
    $region15: #{tpu_custom_call.1} parent=1 // pred_check_branch
      %43 = sbr.rel (0) target = $region17
    $region16: #{tpu_custom_call.1} parent=1 // pred_region
      %45 = dma.done [#allocation4], 256
    $region17: #{tpu_custom_call.1} parent=1 // pred_fallthru
      _
    %46 = vsyncpa [#allocation3], 1
    %47 = vsyncpa [#allocation4], 1

</llo_original>
